<compile_context>
chip_gen: v5e
topology: v5e:2x2
jax: 0.10.0
libtpu: 0.0.40
codegen_flags: <defaults>
</compile_context>

<pallas_src>
import functools

import jax
import jax.numpy as jnp
import numpy as np
from jax.experimental import pallas as pl
from jax.experimental.pallas import tpu as pltpu

HIDDEN_SIZE = 50
INPUT_SIZE = 1
NUM_LAYERS = 1            # single-layer LSTM, as in the module

HP = 64                   # per-gate lane padding (H=50 <= 64) -> gates are 4*64 = 256 wide
B_TILE = 8                # batch rows per grid step (one sublane tile)
GATE_PERM = (0, 1, 3, 2)  # PyTorch gate order (i, f, g, o) -> kernel order (i, f, o, g)


# ----------------------------- Pallas kernel ------------------------------ #
def _lstm_fc_kernel(x_ref, w_ih_ref, w_hh_ref, b_ref, w_fc_ref, b_fc_ref,
                    out_ref, xp_ref):
    """One batch tile of the whole-sequence LSTM recurrence + final Linear, all in VMEM.

    x_ref   : (Bt, T)       f32  lane-dense inputs (time on lanes), D==1 squeezed
    w_ih_ref: (1, 4*Hp)     f32  input->gate weights for the single input feature
    w_hh_ref: (Hp, 4*Hp)    bf16 hidden->gate weights (transposed), gate order (i, f, o, g)
    b_ref   : (1, 4*Hp)     f32  b_ih + b_hh combined
    w_fc_ref: (1, Hp)       f32  final Linear weights
    b_fc_ref: (1, 1)        f32  final Linear bias
    out_ref : (Bt, 1)       f32
    xp_ref  : (T, Bt, 4*Hp) f32  scratch: precomputed input projection (+ bias)
    """
    T, Bt, G = xp_ref.shape
    Hp = w_hh_ref.shape[0]

    # --- 1) Input projection + bias for ALL timesteps.  D == 1, so this is an outer
    #        product: pure VPU broadcast multiply (no degenerate K=1 MXU matmul), and it
    #        is entirely off the serial h/c chain.  Loop-invariant broadcasts are hoisted
    #        (JAX does not CSE broadcast_in_dim).
    w_row = jnp.broadcast_to(w_ih_ref[...], (Bt, G))
    bias = jnp.broadcast_to(b_ref[...], (Bt, G))
    for t in range(T):                       # static python loop; each iter writes its slot
        xp_ref[t] = x_ref[:, t:t + 1] * w_row + bias

    # --- 2) Serial recurrence: one small bf16 MXU push ((Bt,64)@(64,256)) plus one sigmoid
    #        slab + tanh per step.  h/c state and accumulation stay in f32.
    w_hh = w_hh_ref[...]                     # loaded once; loop-invariant

    def step(t, carry):
        h, c = carry
        gates = xp_ref[t] + jnp.dot(h.astype(jnp.bfloat16), w_hh,
                                    preferred_element_type=jnp.float32)   # (Bt, 4*Hp)
        sig = jax.nn.sigmoid(gates[:, :3 * Hp])   # gates packed (i, f, o, g): one sigmoid
        i = sig[:, 0 * Hp:1 * Hp]                 # slab over 3*Hp contiguous lanes,
        f = sig[:, 1 * Hp:2 * Hp]                 # one tanh for the cell gate
        o = sig[:, 2 * Hp:3 * Hp]
        g = jnp.tanh(gates[:, 3 * Hp:])
        c_new = f * c + i * g
        h_new = o * jnp.tanh(c_new)
        return (h_new, c_new)

    h0 = jnp.zeros((Bt, Hp), jnp.float32)
    c0 = jnp.zeros((Bt, Hp), jnp.float32)
    # Modest unroll: keeps LLO scheduling visibility across steps without exploding
    # program size / compile time for long sequences.
    h_T, _ = jax.lax.fori_loop(0, T, step, (h0, c0), unroll=min(T, 8))
    # TODO(synk): hold W_hh stationary in the MXU across the unrolled steps via explicit
    # driving (pltpu.matmul_push_rhs / matmul_acc_lhs / matmul_pop) once a per-chip
    # mxu_index mapping is plumbed; the 64-lane gate repack above already cuts per-step
    # weight streaming 4x (128x512 -> 64x256).

    # --- 3) Final Linear (single output unit): VPU multiply + cross-lane reduce, no MXU.
    out_ref[...] = (jnp.sum(h_T * w_fc_ref[...], axis=-1, keepdims=True)
                    + b_fc_ref[...])


# --------------------------- One-time weight packing ----------------------- #
def _pack_gate_stacked(w, Hp, Kp):
    """PyTorch gate-stacked (4H, K) -> transposed (Kp, 4*Hp), gates reordered (i,f,o,g),
    each gate zero-padded from H to Hp lanes, K zero-padded to Kp rows."""
    fourH, K = w.shape
    H = fourH // 4
    w4 = jnp.stack([w.reshape(4, H, K)[g] for g in GATE_PERM]).astype(jnp.float32)
    blk = jnp.zeros((4, Hp, Kp), jnp.float32).at[:, :H, :K].set(w4)       # (4, Hp, Kp)
    return jnp.transpose(blk, (2, 0, 1)).reshape(Kp, 4 * Hp)              # (Kp, 4*Hp)


def _pack_gate_bias(b, Hp):
    H = b.shape[0] // 4
    b4 = jnp.stack([b.reshape(4, H)[g] for g in GATE_PERM]).astype(jnp.float32)
    return jnp.zeros((4, Hp), jnp.float32).at[:, :H].set(b4).reshape(1, 4 * Hp)


def pack_lstm_params(params, *, Hp=HP):
    """Repack PyTorch-layout LSTM + Linear params once into the kernel layout."""
    w_ih, w_hh, b_ih, b_hh, w_fc, b_fc = params
    H = w_hh.shape[1]
    assert H <= Hp
    w_ih_p = _pack_gate_stacked(w_ih, Hp, 1)                        # (1, 4Hp)  f32
    # Recurrent weights pre-cast to bf16 once (MXU-native); f32 accumulation in-kernel.
    w_hh_p = _pack_gate_stacked(w_hh, Hp, Hp).astype(jnp.bfloat16)  # (Hp, 4Hp) bf16
    b_p = _pack_gate_bias(b_ih + b_hh, Hp)                          # (1, 4Hp)  f32
    w_fc_p = jnp.zeros((1, Hp), jnp.float32).at[0, :H].set(w_fc[0].astype(jnp.float32))
    b_fc_p = b_fc.astype(jnp.float32).reshape(1, 1)
    return (w_ih_p, w_hh_p, b_p, w_fc_p, b_fc_p)


# ------------------------------ JAX wrapper ------------------------------- #
@functools.partial(jax.jit, static_argnums=(2,))
def _lstm_forward_impl(x, packed, Bp):
    w_ih_p, w_hh_p, b_p, w_fc_p, b_fc_p = packed
    B, T, D = x.shape
    assert D == 1, "LSTMModel uses input_size=1"
    assert Bp % B_TILE == 0 and Bp >= B
    Hp, G = w_hh_p.shape

    # Lane-dense input: batch on sublanes, time on lanes (D==1 squeezed away).
    x_p = jnp.zeros((Bp, T), jnp.float32).at[:B, :].set(x[..., 0].astype(jnp.float32))

    # Explicit scoped-VMEM budget, dominated by the xp scratch (T * Bt * 4Hp * 4 bytes).
    xp_bytes = T * B_TILE * G * 4
    vmem_limit = int(min(112 * 2**20, max(32 * 2**20, 2 * xp_bytes + (8 << 20))))
    # TODO(synk): for long T, chunk the sequence with an extra "arbitrary" grid axis
    # carrying h/c in persistent VMEM scratch so the xp footprint is O(chunk), not O(T)
    # (needed within v7x's 64 MiB VMEM and v5e's 16 MiB scoped default).

    out_p = pl.pallas_call(
        _lstm_fc_kernel,
        out_shape=jax.ShapeDtypeStruct((Bp, 1), jnp.float32),
        grid=(Bp // B_TILE,),            # batch tiles; "parallel" -> both TCs on v7x
        in_specs=[
            pl.BlockSpec((B_TILE, T), lambda i: (i, 0)),   # x (lane-dense)
            pl.BlockSpec((1, G), lambda i: (0, 0)),        # w_ih row
            pl.BlockSpec((Hp, G), lambda i: (0, 0)),       # w_hh (bf16)
            pl.BlockSpec((1, G), lambda i: (0, 0)),        # combined bias
            pl.BlockSpec((1, Hp), lambda i: (0, 0)),       # fc weight
            pl.BlockSpec((1, 1), lambda i: (0, 0)),        # fc bias
        ],
        out_specs=pl.BlockSpec((B_TILE, 1), lambda i: (i, 0)),
        scratch_shapes=[pltpu.VMEM((T, B_TILE, G), jnp.float32)],
        compiler_params=pltpu.CompilerParams(
            dimension_semantics=("parallel",),
            vmem_limit_bytes=vmem_limit),
    )(x_p, w_ih_p, w_hh_p, b_p, w_fc_p, b_fc_p)

    return out_p[:B, :1]                                   # (B, 1)


def lstm_model_forward(x, packed, *, Bp=8):
    """Replicates LSTMModel.forward(x) for x of shape (B, T, input_size).
    For batched deployments raise Bp (multiples of 8, e.g. 128+): extra batch tiles become
    grid steps that shard across TensorCores (v7x) while the per-step MXU latency is
    essentially flat in the row dimension until the MXU fills."""
    return _lstm_forward_impl(x, packed, Bp)


# --------------------------- Pure-JAX reference ---------------------------- #
def lstm_model_reference(x, params):
    w_ih, w_hh, b_ih, b_hh, w_fc, b_fc = params
    B, T, _ = x.shape
    H = w_hh.shape[1]
    h = jnp.zeros((B, H), jnp.float32)
    c = jnp.zeros((B, H), jnp.float32)
    for t in range(T):
        gates = x[:, t] @ w_ih.T + b_ih + h @ w_hh.T + b_hh
        i = jax.nn.sigmoid(gates[:, 0 * H:1 * H])
        f = jax.nn.sigmoid(gates[:, 1 * H:2 * H])
        g = jnp.tanh(gates[:, 2 * H:3 * H])
        o = jax.nn.sigmoid(gates[:, 3 * H:4 * H])
        c = f * c + i * g
        h = o * jnp.tanh(c)
    return h @ w_fc.T + b_fc                                            # (B, 1)


# ----------------------------------- main ---------------------------------- #
if __name__ == "__main__":
    key = jax.random.PRNGKey(0)
    k_x, k1, k2, k3, k4, k5, k6 = jax.random.split(key, 7)

    B, T = 2, 8
    H, D = HIDDEN_SIZE, INPUT_SIZE
    bound = 1.0 / np.sqrt(H)  # matches PyTorch's default LSTM/Linear init range

    x = jax.random.normal(k_x, (B, T, D), dtype=jnp.float32)

    params = (
        jax.random.uniform(k1, (4 * H, D), jnp.float32, -bound, bound),  # weight_ih_l0
        jax.random.uniform(k2, (4 * H, H), jnp.float32, -bound, bound),  # weight_hh_l0
        jax.random.uniform(k3, (4 * H,), jnp.float32, -bound, bound),    # bias_ih_l0
        jax.random.uniform(k4, (4 * H,), jnp.float32, -bound, bound),    # bias_hh_l0
        jax.random.uniform(k5, (1, H), jnp.float32, -bound, bound),      # fc.weight
        jax.random.uniform(k6, (1,), jnp.float32, -bound, bound),        # fc.bias
    )

    # One-time weight repacking (done once per model, reused across calls).
    packed = jax.block_until_ready(pack_lstm_params(params))

    out = jax.block_until_ready(lstm_model_forward(x, packed))
    ref = jax.block_until_ready(lstm_model_reference(x, params))

    assert out.shape == (B, 1), out.shape
    # Recurrent matmul uses bf16 operands (f32 accumulation / f32 state); compare against
    # the pure-f32 reference with a correspondingly relaxed tolerance.
    np.testing.assert_allclose(np.asarray(out), np.asarray(ref), rtol=2e-2, atol=2e-2)

    print("KERNEL_OK")
</pallas_src>

<mosaic_0001>
module attributes {stable_mosaic.version = 11 : i64} {
  func.func @_lstm_fc_kernel(%arg0: i32, %arg1: memref<8x8xf32, #tpu.memory_space<vmem>>, %arg2: memref<1x256xf32, #tpu.memory_space<vmem>>, %arg3: memref<64x256xbf16, #tpu.memory_space<vmem>>, %arg4: memref<1x256xf32, #tpu.memory_space<vmem>>, %arg5: memref<1x64xf32, #tpu.memory_space<vmem>>, %arg6: memref<1x1xf32, #tpu.memory_space<vmem>>, %arg7: memref<8x1xf32, #tpu.memory_space<vmem>>, %arg8: memref<8x8x256xf32, #tpu.memory_space<vmem>>) attributes {dimension_semantics = [#tpu.dimension_semantics<parallel>], iteration_bounds = array<i64: 1>, scalar_prefetch = 0 : i64, scratch_operands = 1 : i64, tpu.core_type = #tpu.core_type<tc>, window_params = [{transform_indices = @transform_0, window_bounds = array<i64: 8, 8>}, {pipeline_mode = #tpu.pipeline_mode<synchronous>, transform_indices = @transform_1, window_bounds = array<i64: 1, 256>}, {pipeline_mode = #tpu.pipeline_mode<synchronous>, transform_indices = @transform_2, window_bounds = array<i64: 64, 256>}, {pipeline_mode = #tpu.pipeline_mode<synchronous>, transform_indices = @transform_3, window_bounds = array<i64: 1, 256>}, {pipeline_mode = #tpu.pipeline_mode<synchronous>, transform_indices = @transform_4, window_bounds = array<i64: 1, 64>}, {pipeline_mode = #tpu.pipeline_mode<synchronous>, transform_indices = @transform_5, window_bounds = array<i64: 1, 1>}, {transform_indices = @transform_6, window_bounds = array<i64: 8, 1>}]} {
    %c0 = arith.constant 0 : index
    %c0_0 = arith.constant 0 : index
    %0 = vector.load %arg2[%c0, %c0_0] : memref<1x256xf32, #tpu.memory_space<vmem>>, vector<1x256xf32>
    %1 = vector.shape_cast %0 : vector<1x256xf32> to vector<1x256xf32>
    %2 = vector.broadcast %1 : vector<1x256xf32> to vector<8x256xf32>
    %c0_1 = arith.constant 0 : index
    %c0_2 = arith.constant 0 : index
    %3 = vector.load %arg4[%c0_1, %c0_2] : memref<1x256xf32, #tpu.memory_space<vmem>>, vector<1x256xf32>
    %4 = vector.shape_cast %3 : vector<1x256xf32> to vector<1x256xf32>
    %5 = vector.broadcast %4 : vector<1x256xf32> to vector<8x256xf32>
    %c0_3 = arith.constant 0 : index
    %c0_4 = arith.constant 0 : index
    %6 = vector.load %arg1[%c0_3, %c0_4] : memref<8x8xf32, #tpu.memory_space<vmem>>, vector<8x1xf32>
    %7 = vector.broadcast %6 : vector<8x1xf32> to vector<8x256xf32>
    %8 = arith.mulf %7, %2 : vector<8x256xf32>
    %9 = arith.addf %8, %5 : vector<8x256xf32>
    %c0_5 = arith.constant 0 : index
    %c0_6 = arith.constant 0 : index
    %c0_7 = arith.constant 0 : index
    %10 = vector.load %arg8[%c0_5, %c0_6, %c0_7] : memref<8x8x256xf32, #tpu.memory_space<vmem>>, vector<1x8x256xf32>
    %11 = vector.shape_cast %10 : vector<1x8x256xf32> to vector<8x256xf32>
    %12 = vector.shape_cast %9 : vector<8x256xf32> to vector<1x8x256xf32>
    tpu.vector_store %arg8[%c0_5, %c0_6, %c0_7], %12 {strides = array<i32>} : memref<8x8x256xf32, #tpu.memory_space<vmem>>, vector<1x8x256xf32>,
    %c0_8 = arith.constant 0 : index
    %c1 = arith.constant 1 : index
    %13 = vector.load %arg1[%c0_8, %c1] : memref<8x8xf32, #tpu.memory_space<vmem>>, vector<8x1xf32>
    %14 = vector.broadcast %13 : vector<8x1xf32> to vector<8x256xf32>
    %15 = arith.mulf %14, %2 : vector<8x256xf32>
    %16 = arith.addf %15, %5 : vector<8x256xf32>
    %c1_9 = arith.constant 1 : index
    %c0_10 = arith.constant 0 : index
    %c0_11 = arith.constant 0 : index
    %17 = vector.load %arg8[%c1_9, %c0_10, %c0_11] : memref<8x8x256xf32, #tpu.memory_space<vmem>>, vector<1x8x256xf32>
    %18 = vector.shape_cast %17 : vector<1x8x256xf32> to vector<8x256xf32>
    %19 = vector.shape_cast %16 : vector<8x256xf32> to vector<1x8x256xf32>
    tpu.vector_store %arg8[%c1_9, %c0_10, %c0_11], %19 {strides = array<i32>} : memref<8x8x256xf32, #tpu.memory_space<vmem>>, vector<1x8x256xf32>,
    %c0_12 = arith.constant 0 : index
    %c2 = arith.constant 2 : index
    %20 = vector.load %arg1[%c0_12, %c2] : memref<8x8xf32, #tpu.memory_space<vmem>>, vector<8x1xf32>
    %21 = vector.broadcast %20 : vector<8x1xf32> to vector<8x256xf32>
    %22 = arith.mulf %21, %2 : vector<8x256xf32>
    %23 = arith.addf %22, %5 : vector<8x256xf32>
    %c2_13 = arith.constant 2 : index
    %c0_14 = arith.constant 0 : index
    %c0_15 = arith.constant 0 : index
    %24 = vector.load %arg8[%c2_13, %c0_14, %c0_15] : memref<8x8x256xf32, #tpu.memory_space<vmem>>, vector<1x8x256xf32>
    %25 = vector.shape_cast %24 : vector<1x8x256xf32> to vector<8x256xf32>
    %26 = vector.shape_cast %23 : vector<8x256xf32> to vector<1x8x256xf32>
    tpu.vector_store %arg8[%c2_13, %c0_14, %c0_15], %26 {strides = array<i32>} : memref<8x8x256xf32, #tpu.memory_space<vmem>>, vector<1x8x256xf32>,
    %c0_16 = arith.constant 0 : index
    %c3 = arith.constant 3 : index
    %27 = vector.load %arg1[%c0_16, %c3] : memref<8x8xf32, #tpu.memory_space<vmem>>, vector<8x1xf32>
    %28 = vector.broadcast %27 : vector<8x1xf32> to vector<8x256xf32>
    %29 = arith.mulf %28, %2 : vector<8x256xf32>
    %30 = arith.addf %29, %5 : vector<8x256xf32>
    %c3_17 = arith.constant 3 : index
    %c0_18 = arith.constant 0 : index
    %c0_19 = arith.constant 0 : index
    %31 = vector.load %arg8[%c3_17, %c0_18, %c0_19] : memref<8x8x256xf32, #tpu.memory_space<vmem>>, vector<1x8x256xf32>
    %32 = vector.shape_cast %31 : vector<1x8x256xf32> to vector<8x256xf32>
    %33 = vector.shape_cast %30 : vector<8x256xf32> to vector<1x8x256xf32>
    tpu.vector_store %arg8[%c3_17, %c0_18, %c0_19], %33 {strides = array<i32>} : memref<8x8x256xf32, #tpu.memory_space<vmem>>, vector<1x8x256xf32>,
    %c0_20 = arith.constant 0 : index
    %c4 = arith.constant 4 : index
    %34 = vector.load %arg1[%c0_20, %c4] : memref<8x8xf32, #tpu.memory_space<vmem>>, vector<8x1xf32>
    %35 = vector.broadcast %34 : vector<8x1xf32> to vector<8x256xf32>
    %36 = arith.mulf %35, %2 : vector<8x256xf32>
    %37 = arith.addf %36, %5 : vector<8x256xf32>
    %c4_21 = arith.constant 4 : index
    %c0_22 = arith.constant 0 : index
    %c0_23 = arith.constant 0 : index
    %38 = vector.load %arg8[%c4_21, %c0_22, %c0_23] : memref<8x8x256xf32, #tpu.memory_space<vmem>>, vector<1x8x256xf32>
    %39 = vector.shape_cast %38 : vector<1x8x256xf32> to vector<8x256xf32>
    %40 = vector.shape_cast %37 : vector<8x256xf32> to vector<1x8x256xf32>
    tpu.vector_store %arg8[%c4_21, %c0_22, %c0_23], %40 {strides = array<i32>} : memref<8x8x256xf32, #tpu.memory_space<vmem>>, vector<1x8x256xf32>,
    %c0_24 = arith.constant 0 : index
    %c5 = arith.constant 5 : index
    %41 = vector.load %arg1[%c0_24, %c5] : memref<8x8xf32, #tpu.memory_space<vmem>>, vector<8x1xf32>
    %42 = vector.broadcast %41 : vector<8x1xf32> to vector<8x256xf32>
    %43 = arith.mulf %42, %2 : vector<8x256xf32>
    %44 = arith.addf %43, %5 : vector<8x256xf32>
    %c5_25 = arith.constant 5 : index
    %c0_26 = arith.constant 0 : index
    %c0_27 = arith.constant 0 : index
    %45 = vector.load %arg8[%c5_25, %c0_26, %c0_27] : memref<8x8x256xf32, #tpu.memory_space<vmem>>, vector<1x8x256xf32>
    %46 = vector.shape_cast %45 : vector<1x8x256xf32> to vector<8x256xf32>
    %47 = vector.shape_cast %44 : vector<8x256xf32> to vector<1x8x256xf32>
    tpu.vector_store %arg8[%c5_25, %c0_26, %c0_27], %47 {strides = array<i32>} : memref<8x8x256xf32, #tpu.memory_space<vmem>>, vector<1x8x256xf32>,
    %c0_28 = arith.constant 0 : index
    %c6 = arith.constant 6 : index
    %48 = vector.load %arg1[%c0_28, %c6] : memref<8x8xf32, #tpu.memory_space<vmem>>, vector<8x1xf32>
    %49 = vector.broadcast %48 : vector<8x1xf32> to vector<8x256xf32>
    %50 = arith.mulf %49, %2 : vector<8x256xf32>
    %51 = arith.addf %50, %5 : vector<8x256xf32>
    %c6_29 = arith.constant 6 : index
    %c0_30 = arith.constant 0 : index
    %c0_31 = arith.constant 0 : index
    %52 = vector.load %arg8[%c6_29, %c0_30, %c0_31] : memref<8x8x256xf32, #tpu.memory_space<vmem>>, vector<1x8x256xf32>
    %53 = vector.shape_cast %52 : vector<1x8x256xf32> to vector<8x256xf32>
    %54 = vector.shape_cast %51 : vector<8x256xf32> to vector<1x8x256xf32>
    tpu.vector_store %arg8[%c6_29, %c0_30, %c0_31], %54 {strides = array<i32>} : memref<8x8x256xf32, #tpu.memory_space<vmem>>, vector<1x8x256xf32>,
    %c0_32 = arith.constant 0 : index
    %c7 = arith.constant 7 : index
    %55 = vector.load %arg1[%c0_32, %c7] : memref<8x8xf32, #tpu.memory_space<vmem>>, vector<8x1xf32>
    %56 = vector.broadcast %55 : vector<8x1xf32> to vector<8x256xf32>
    %57 = arith.mulf %56, %2 : vector<8x256xf32>
    %58 = arith.addf %57, %5 : vector<8x256xf32>
    %c7_33 = arith.constant 7 : index
    %c0_34 = arith.constant 0 : index
    %c0_35 = arith.constant 0 : index
    %59 = vector.load %arg8[%c7_33, %c0_34, %c0_35] : memref<8x8x256xf32, #tpu.memory_space<vmem>>, vector<1x8x256xf32>
    %60 = vector.shape_cast %59 : vector<1x8x256xf32> to vector<8x256xf32>
    %61 = vector.shape_cast %58 : vector<8x256xf32> to vector<1x8x256xf32>
    tpu.vector_store %arg8[%c7_33, %c0_34, %c0_35], %61 {strides = array<i32>} : memref<8x8x256xf32, #tpu.memory_space<vmem>>, vector<1x8x256xf32>,
    %c0_36 = arith.constant 0 : index
    %c0_37 = arith.constant 0 : index
    %62 = vector.load %arg3[%c0_36, %c0_37] : memref<64x256xbf16, #tpu.memory_space<vmem>>, vector<64x256xbf16>
    %cst = arith.constant 0.000000e+00 : f32
    %63 = vector.broadcast %cst : f32 to vector<8x64xf32>
    %cst_38 = arith.constant 0.000000e+00 : f32
    %64 = vector.broadcast %cst_38 : f32 to vector<8x64xf32>
    %c0_i32 = arith.constant 0 : i32
    %65 = arith.index_cast %c0_i32 : i32 to index
    %c0_39 = arith.constant 0 : index
    %c0_40 = arith.constant 0 : index
    %66 = vector.load %arg8[%65, %c0_39, %c0_40] : memref<8x8x256xf32, #tpu.memory_space<vmem>>, vector<1x8x256xf32>
    %67 = vector.shape_cast %66 : vector<1x8x256xf32> to vector<8x256xf32>
    %68 = arith.truncf %63 : vector<8x64xf32> to vector<8x64xbf16>
    %cst_41 = arith.constant dense<0.000000e+00> : vector<8x256xf32>
    %69 = tpu.matmul %68, %62, %cst_41 {dimension_numbers = #tpu.dot_dimension_numbers<[1], [0], [0], [1], [0, 0, 1, 1], [], []>} : vector<8x64xbf16>, vector<64x256xbf16>, vector<8x256xf32> -> vector<8x256xf32>
    %70 = arith.addf %67, %69 : vector<8x256xf32>
    %71 = vector.extract_strided_slice %70 {offsets = [0, 0], sizes = [8, 192], strides = [1, 1]} : vector<8x256xf32> to vector<8x192xf32>
    %72 = arith.negf %71 : vector<8x192xf32>
    %73 = math.exp %72 : vector<8x192xf32>
    %cst_42 = arith.constant 1.000000e+00 : f32
    %74 = vector.broadcast %cst_42 : f32 to vector<8x192xf32>
    %75 = arith.addf %74, %73 : vector<8x192xf32>
    %76 = arith.divf %74, %75 : vector<8x192xf32>
    %77 = vector.extract_strided_slice %76 {offsets = [0, 0], sizes = [8, 64], strides = [1, 1]} : vector<8x192xf32> to vector<8x64xf32>
    %78 = vector.extract_strided_slice %76 {offsets = [0, 64], sizes = [8, 64], strides = [1, 1]} : vector<8x192xf32> to vector<8x64xf32>
    %79 = vector.extract_strided_slice %76 {offsets = [0, 128], sizes = [8, 64], strides = [1, 1]} : vector<8x192xf32> to vector<8x64xf32>
    %80 = vector.extract_strided_slice %70 {offsets = [0, 192], sizes = [8, 64], strides = [1, 1]} : vector<8x256xf32> to vector<8x64xf32>
    %81 = math.tanh %80 : vector<8x64xf32>
    %82 = arith.mulf %78, %64 : vector<8x64xf32>
    %83 = arith.mulf %77, %81 : vector<8x64xf32>
    %84 = arith.addf %82, %83 : vector<8x64xf32>
    %85 = math.tanh %84 : vector<8x64xf32>
    %86 = arith.mulf %79, %85 : vector<8x64xf32>
    %c1_i32 = arith.constant 1 : i32
    %87 = arith.index_cast %c1_i32 : i32 to index
    %c0_43 = arith.constant 0 : index
    %c0_44 = arith.constant 0 : index
    %88 = vector.load %arg8[%87, %c0_43, %c0_44] : memref<8x8x256xf32, #tpu.memory_space<vmem>>, vector<1x8x256xf32>
    %89 = vector.shape_cast %88 : vector<1x8x256xf32> to vector<8x256xf32>
    %90 = arith.truncf %86 : vector<8x64xf32> to vector<8x64xbf16>
    %cst_45 = arith.constant dense<0.000000e+00> : vector<8x256xf32>
    %91 = tpu.matmul %90, %62, %cst_45 {dimension_numbers = #tpu.dot_dimension_numbers<[1], [0], [0], [1], [0, 0, 1, 1], [], []>} : vector<8x64xbf16>, vector<64x256xbf16>, vector<8x256xf32> -> vector<8x256xf32>
    %92 = arith.addf %89, %91 : vector<8x256xf32>
    %93 = vector.extract_strided_slice %92 {offsets = [0, 0], sizes = [8, 192], strides = [1, 1]} : vector<8x256xf32> to vector<8x192xf32>
    %94 = arith.negf %93 : vector<8x192xf32>
    %95 = math.exp %94 : vector<8x192xf32>
    %cst_46 = arith.constant 1.000000e+00 : f32
    %96 = vector.broadcast %cst_46 : f32 to vector<8x192xf32>
    %97 = arith.addf %96, %95 : vector<8x192xf32>
    %98 = arith.divf %96, %97 : vector<8x192xf32>
    %99 = vector.extract_strided_slice %98 {offsets = [0, 0], sizes = [8, 64], strides = [1, 1]} : vector<8x192xf32> to vector<8x64xf32>
    %100 = vector.extract_strided_slice %98 {offsets = [0, 64], sizes = [8, 64], strides = [1, 1]} : vector<8x192xf32> to vector<8x64xf32>
    %101 = vector.extract_strided_slice %98 {offsets = [0, 128], sizes = [8, 64], strides = [1, 1]} : vector<8x192xf32> to vector<8x64xf32>
    %102 = vector.extract_strided_slice %92 {offsets = [0, 192], sizes = [8, 64], strides = [1, 1]} : vector<8x256xf32> to vector<8x64xf32>
    %103 = math.tanh %102 : vector<8x64xf32>
    %104 = arith.mulf %100, %84 : vector<8x64xf32>
    %105 = arith.mulf %99, %103 : vector<8x64xf32>
    %106 = arith.addf %104, %105 : vector<8x64xf32>
    %107 = math.tanh %106 : vector<8x64xf32>
    %108 = arith.mulf %101, %107 : vector<8x64xf32>
    %c2_i32 = arith.constant 2 : i32
    %109 = arith.index_cast %c2_i32 : i32 to index
    %c0_47 = arith.constant 0 : index
    %c0_48 = arith.constant 0 : index
    %110 = vector.load %arg8[%109, %c0_47, %c0_48] : memref<8x8x256xf32, #tpu.memory_space<vmem>>, vector<1x8x256xf32>
    %111 = vector.shape_cast %110 : vector<1x8x256xf32> to vector<8x256xf32>
    %112 = arith.truncf %108 : vector<8x64xf32> to vector<8x64xbf16>
    %cst_49 = arith.constant dense<0.000000e+00> : vector<8x256xf32>
    %113 = tpu.matmul %112, %62, %cst_49 {dimension_numbers = #tpu.dot_dimension_numbers<[1], [0], [0], [1], [0, 0, 1, 1], [], []>} : vector<8x64xbf16>, vector<64x256xbf16>, vector<8x256xf32> -> vector<8x256xf32>
    %114 = arith.addf %111, %113 : vector<8x256xf32>
    %115 = vector.extract_strided_slice %114 {offsets = [0, 0], sizes = [8, 192], strides = [1, 1]} : vector<8x256xf32> to vector<8x192xf32>
    %116 = arith.negf %115 : vector<8x192xf32>
    %117 = math.exp %116 : vector<8x192xf32>
    %cst_50 = arith.constant 1.000000e+00 : f32
    %118 = vector.broadcast %cst_50 : f32 to vector<8x192xf32>
    %119 = arith.addf %118, %117 : vector<8x192xf32>
    %120 = arith.divf %118, %119 : vector<8x192xf32>
    %121 = vector.extract_strided_slice %120 {offsets = [0, 0], sizes = [8, 64], strides = [1, 1]} : vector<8x192xf32> to vector<8x64xf32>
    %122 = vector.extract_strided_slice %120 {offsets = [0, 64], sizes = [8, 64], strides = [1, 1]} : vector<8x192xf32> to vector<8x64xf32>
    %123 = vector.extract_strided_slice %120 {offsets = [0, 128], sizes = [8, 64], strides = [1, 1]} : vector<8x192xf32> to vector<8x64xf32>
    %124 = vector.extract_strided_slice %114 {offsets = [0, 192], sizes = [8, 64], strides = [1, 1]} : vector<8x256xf32> to vector<8x64xf32>
    %125 = math.tanh %124 : vector<8x64xf32>
    %126 = arith.mulf %122, %106 : vector<8x64xf32>
    %127 = arith.mulf %121, %125 : vector<8x64xf32>
    %128 = arith.addf %126, %127 : vector<8x64xf32>
    %129 = math.tanh %128 : vector<8x64xf32>
    %130 = arith.mulf %123, %129 : vector<8x64xf32>
    %c3_i32 = arith.constant 3 : i32
    %131 = arith.index_cast %c3_i32 : i32 to index
    %c0_51 = arith.constant 0 : index
    %c0_52 = arith.constant 0 : index
    %132 = vector.load %arg8[%131, %c0_51, %c0_52] : memref<8x8x256xf32, #tpu.memory_space<vmem>>, vector<1x8x256xf32>
    %133 = vector.shape_cast %132 : vector<1x8x256xf32> to vector<8x256xf32>
    %134 = arith.truncf %130 : vector<8x64xf32> to vector<8x64xbf16>
    %cst_53 = arith.constant dense<0.000000e+00> : vector<8x256xf32>
    %135 = tpu.matmul %134, %62, %cst_53 {dimension_numbers = #tpu.dot_dimension_numbers<[1], [0], [0], [1], [0, 0, 1, 1], [], []>} : vector<8x64xbf16>, vector<64x256xbf16>, vector<8x256xf32> -> vector<8x256xf32>
    %136 = arith.addf %133, %135 : vector<8x256xf32>
    %137 = vector.extract_strided_slice %136 {offsets = [0, 0], sizes = [8, 192], strides = [1, 1]} : vector<8x256xf32> to vector<8x192xf32>
    %138 = arith.negf %137 : vector<8x192xf32>
    %139 = math.exp %138 : vector<8x192xf32>
    %cst_54 = arith.constant 1.000000e+00 : f32
    %140 = vector.broadcast %cst_54 : f32 to vector<8x192xf32>
    %141 = arith.addf %140, %139 : vector<8x192xf32>
    %142 = arith.divf %140, %141 : vector<8x192xf32>
    %143 = vector.extract_strided_slice %142 {offsets = [0, 0], sizes = [8, 64], strides = [1, 1]} : vector<8x192xf32> to vector<8x64xf32>
    %144 = vector.extract_strided_slice %142 {offsets = [0, 64], sizes = [8, 64], strides = [1, 1]} : vector<8x192xf32> to vector<8x64xf32>
    %145 = vector.extract_strided_slice %142 {offsets = [0, 128], sizes = [8, 64], strides = [1, 1]} : vector<8x192xf32> to vector<8x64xf32>
    %146 = vector.extract_strided_slice %136 {offsets = [0, 192], sizes = [8, 64], strides = [1, 1]} : vector<8x256xf32> to vector<8x64xf32>
    %147 = math.tanh %146 : vector<8x64xf32>
    %148 = arith.mulf %144, %128 : vector<8x64xf32>
    %149 = arith.mulf %143, %147 : vector<8x64xf32>
    %150 = arith.addf %148, %149 : vector<8x64xf32>
    %151 = math.tanh %150 : vector<8x64xf32>
    %152 = arith.mulf %145, %151 : vector<8x64xf32>
    %c4_i32 = arith.constant 4 : i32
    %153 = arith.index_cast %c4_i32 : i32 to index
    %c0_55 = arith.constant 0 : index
    %c0_56 = arith.constant 0 : index
    %154 = vector.load %arg8[%153, %c0_55, %c0_56] : memref<8x8x256xf32, #tpu.memory_space<vmem>>, vector<1x8x256xf32>
    %155 = vector.shape_cast %154 : vector<1x8x256xf32> to vector<8x256xf32>
    %156 = arith.truncf %152 : vector<8x64xf32> to vector<8x64xbf16>
    %cst_57 = arith.constant dense<0.000000e+00> : vector<8x256xf32>
    %157 = tpu.matmul %156, %62, %cst_57 {dimension_numbers = #tpu.dot_dimension_numbers<[1], [0], [0], [1], [0, 0, 1, 1], [], []>} : vector<8x64xbf16>, vector<64x256xbf16>, vector<8x256xf32> -> vector<8x256xf32>
    %158 = arith.addf %155, %157 : vector<8x256xf32>
    %159 = vector.extract_strided_slice %158 {offsets = [0, 0], sizes = [8, 192], strides = [1, 1]} : vector<8x256xf32> to vector<8x192xf32>
    %160 = arith.negf %159 : vector<8x192xf32>
    %161 = math.exp %160 : vector<8x192xf32>
    %cst_58 = arith.constant 1.000000e+00 : f32
    %162 = vector.broadcast %cst_58 : f32 to vector<8x192xf32>
    %163 = arith.addf %162, %161 : vector<8x192xf32>
    %164 = arith.divf %162, %163 : vector<8x192xf32>
    %165 = vector.extract_strided_slice %164 {offsets = [0, 0], sizes = [8, 64], strides = [1, 1]} : vector<8x192xf32> to vector<8x64xf32>
    %166 = vector.extract_strided_slice %164 {offsets = [0, 64], sizes = [8, 64], strides = [1, 1]} : vector<8x192xf32> to vector<8x64xf32>
    %167 = vector.extract_strided_slice %164 {offsets = [0, 128], sizes = [8, 64], strides = [1, 1]} : vector<8x192xf32> to vector<8x64xf32>
    %168 = vector.extract_strided_slice %158 {offsets = [0, 192], sizes = [8, 64], strides = [1, 1]} : vector<8x256xf32> to vector<8x64xf32>
    %169 = math.tanh %168 : vector<8x64xf32>
    %170 = arith.mulf %166, %150 : vector<8x64xf32>
    %171 = arith.mulf %165, %169 : vector<8x64xf32>
    %172 = arith.addf %170, %171 : vector<8x64xf32>
    %173 = math.tanh %172 : vector<8x64xf32>
    %174 = arith.mulf %167, %173 : vector<8x64xf32>
    %c5_i32 = arith.constant 5 : i32
    %175 = arith.index_cast %c5_i32 : i32 to index
    %c0_59 = arith.constant 0 : index
    %c0_60 = arith.constant 0 : index
    %176 = vector.load %arg8[%175, %c0_59, %c0_60] : memref<8x8x256xf32, #tpu.memory_space<vmem>>, vector<1x8x256xf32>
    %177 = vector.shape_cast %176 : vector<1x8x256xf32> to vector<8x256xf32>
    %178 = arith.truncf %174 : vector<8x64xf32> to vector<8x64xbf16>
    %cst_61 = arith.constant dense<0.000000e+00> : vector<8x256xf32>
    %179 = tpu.matmul %178, %62, %cst_61 {dimension_numbers = #tpu.dot_dimension_numbers<[1], [0], [0], [1], [0, 0, 1, 1], [], []>} : vector<8x64xbf16>, vector<64x256xbf16>, vector<8x256xf32> -> vector<8x256xf32>
    %180 = arith.addf %177, %179 : vector<8x256xf32>
    %181 = vector.extract_strided_slice %180 {offsets = [0, 0], sizes = [8, 192], strides = [1, 1]} : vector<8x256xf32> to vector<8x192xf32>
    %182 = arith.negf %181 : vector<8x192xf32>
    %183 = math.exp %182 : vector<8x192xf32>
    %cst_62 = arith.constant 1.000000e+00 : f32
    %184 = vector.broadcast %cst_62 : f32 to vector<8x192xf32>
    %185 = arith.addf %184, %183 : vector<8x192xf32>
    %186 = arith.divf %184, %185 : vector<8x192xf32>
    %187 = vector.extract_strided_slice %186 {offsets = [0, 0], sizes = [8, 64], strides = [1, 1]} : vector<8x192xf32> to vector<8x64xf32>
    %188 = vector.extract_strided_slice %186 {offsets = [0, 64], sizes = [8, 64], strides = [1, 1]} : vector<8x192xf32> to vector<8x64xf32>
    %189 = vector.extract_strided_slice %186 {offsets = [0, 128], sizes = [8, 64], strides = [1, 1]} : vector<8x192xf32> to vector<8x64xf32>
    %190 = vector.extract_strided_slice %180 {offsets = [0, 192], sizes = [8, 64], strides = [1, 1]} : vector<8x256xf32> to vector<8x64xf32>
    %191 = math.tanh %190 : vector<8x64xf32>
    %192 = arith.mulf %188, %172 : vector<8x64xf32>
    %193 = arith.mulf %187, %191 : vector<8x64xf32>
    %194 = arith.addf %192, %193 : vector<8x64xf32>
    %195 = math.tanh %194 : vector<8x64xf32>
    %196 = arith.mulf %189, %195 : vector<8x64xf32>
    %c6_i32 = arith.constant 6 : i32
    %197 = arith.index_cast %c6_i32 : i32 to index
    %c0_63 = arith.constant 0 : index
    %c0_64 = arith.constant 0 : index
    %198 = vector.load %arg8[%197, %c0_63, %c0_64] : memref<8x8x256xf32, #tpu.memory_space<vmem>>, vector<1x8x256xf32>
    %199 = vector.shape_cast %198 : vector<1x8x256xf32> to vector<8x256xf32>
    %200 = arith.truncf %196 : vector<8x64xf32> to vector<8x64xbf16>
    %cst_65 = arith.constant dense<0.000000e+00> : vector<8x256xf32>
    %201 = tpu.matmul %200, %62, %cst_65 {dimension_numbers = #tpu.dot_dimension_numbers<[1], [0], [0], [1], [0, 0, 1, 1], [], []>} : vector<8x64xbf16>, vector<64x256xbf16>, vector<8x256xf32> -> vector<8x256xf32>
    %202 = arith.addf %199, %201 : vector<8x256xf32>
    %203 = vector.extract_strided_slice %202 {offsets = [0, 0], sizes = [8, 192], strides = [1, 1]} : vector<8x256xf32> to vector<8x192xf32>
    %204 = arith.negf %203 : vector<8x192xf32>
    %205 = math.exp %204 : vector<8x192xf32>
    %cst_66 = arith.constant 1.000000e+00 : f32
    %206 = vector.broadcast %cst_66 : f32 to vector<8x192xf32>
    %207 = arith.addf %206, %205 : vector<8x192xf32>
    %208 = arith.divf %206, %207 : vector<8x192xf32>
    %209 = vector.extract_strided_slice %208 {offsets = [0, 0], sizes = [8, 64], strides = [1, 1]} : vector<8x192xf32> to vector<8x64xf32>
    %210 = vector.extract_strided_slice %208 {offsets = [0, 64], sizes = [8, 64], strides = [1, 1]} : vector<8x192xf32> to vector<8x64xf32>
    %211 = vector.extract_strided_slice %208 {offsets = [0, 128], sizes = [8, 64], strides = [1, 1]} : vector<8x192xf32> to vector<8x64xf32>
    %212 = vector.extract_strided_slice %202 {offsets = [0, 192], sizes = [8, 64], strides = [1, 1]} : vector<8x256xf32> to vector<8x64xf32>
    %213 = math.tanh %212 : vector<8x64xf32>
    %214 = arith.mulf %210, %194 : vector<8x64xf32>
    %215 = arith.mulf %209, %213 : vector<8x64xf32>
    %216 = arith.addf %214, %215 : vector<8x64xf32>
    %217 = math.tanh %216 : vector<8x64xf32>
    %218 = arith.mulf %211, %217 : vector<8x64xf32>
    %c7_i32 = arith.constant 7 : i32
    %219 = arith.index_cast %c7_i32 : i32 to index
    %c0_67 = arith.constant 0 : index
    %c0_68 = arith.constant 0 : index
    %220 = vector.load %arg8[%219, %c0_67, %c0_68] : memref<8x8x256xf32, #tpu.memory_space<vmem>>, vector<1x8x256xf32>
    %221 = vector.shape_cast %220 : vector<1x8x256xf32> to vector<8x256xf32>
    %222 = arith.truncf %218 : vector<8x64xf32> to vector<8x64xbf16>
    %cst_69 = arith.constant dense<0.000000e+00> : vector<8x256xf32>
    %223 = tpu.matmul %222, %62, %cst_69 {dimension_numbers = #tpu.dot_dimension_numbers<[1], [0], [0], [1], [0, 0, 1, 1], [], []>} : vector<8x64xbf16>, vector<64x256xbf16>, vector<8x256xf32> -> vector<8x256xf32>
    %224 = arith.addf %221, %223 : vector<8x256xf32>
    %225 = vector.extract_strided_slice %224 {offsets = [0, 0], sizes = [8, 192], strides = [1, 1]} : vector<8x256xf32> to vector<8x192xf32>
    %226 = arith.negf %225 : vector<8x192xf32>
    %227 = math.exp %226 : vector<8x192xf32>
    %cst_70 = arith.constant 1.000000e+00 : f32
    %228 = vector.broadcast %cst_70 : f32 to vector<8x192xf32>
    %229 = arith.addf %228, %227 : vector<8x192xf32>
    %230 = arith.divf %228, %229 : vector<8x192xf32>
    %231 = vector.extract_strided_slice %230 {offsets = [0, 0], sizes = [8, 64], strides = [1, 1]} : vector<8x192xf32> to vector<8x64xf32>
    %232 = vector.extract_strided_slice %230 {offsets = [0, 64], sizes = [8, 64], strides = [1, 1]} : vector<8x192xf32> to vector<8x64xf32>
    %233 = vector.extract_strided_slice %230 {offsets = [0, 128], sizes = [8, 64], strides = [1, 1]} : vector<8x192xf32> to vector<8x64xf32>
    %234 = vector.extract_strided_slice %224 {offsets = [0, 192], sizes = [8, 64], strides = [1, 1]} : vector<8x256xf32> to vector<8x64xf32>
    %235 = math.tanh %234 : vector<8x64xf32>
    %236 = arith.mulf %232, %216 : vector<8x64xf32>
    %237 = arith.mulf %231, %235 : vector<8x64xf32>
    %238 = arith.addf %236, %237 : vector<8x64xf32>
    %239 = math.tanh %238 : vector<8x64xf32>
    %240 = arith.mulf %233, %239 : vector<8x64xf32>
    %c8_i32 = arith.constant 8 : i32
    %c0_71 = arith.constant 0 : index
    %c0_72 = arith.constant 0 : index
    %241 = vector.load %arg5[%c0_71, %c0_72] : memref<1x64xf32, #tpu.memory_space<vmem>>, vector<1x64xf32>
    %242 = vector.broadcast %241 : vector<1x64xf32> to vector<8x64xf32>
    %243 = arith.mulf %240, %242 : vector<8x64xf32>
    %cst_73 = arith.constant dense<0.000000e+00> : vector<8xf32>
    %244 = vector.multi_reduction <add>, %243, %cst_73 [1] : vector<8x64xf32> to vector<8xf32>
    %245 = vector.shape_cast %244 : vector<8xf32> to vector<8x1xf32>
    %c0_74 = arith.constant 0 : index
    %c0_75 = arith.constant 0 : index
    %246 = vector.load %arg6[%c0_74, %c0_75] : memref<1x1xf32, #tpu.memory_space<vmem>>, vector<1x1xf32>
    %247 = vector.broadcast %246 : vector<1x1xf32> to vector<8x1xf32>
    %248 = arith.addf %245, %247 : vector<8x1xf32>
    %c0_76 = arith.constant 0 : index
    %c0_77 = arith.constant 0 : index
    %249 = vector.load %arg7[%c0_76, %c0_77] : memref<8x1xf32, #tpu.memory_space<vmem>>, vector<8x1xf32>
    tpu.vector_store %arg7[%c0_76, %c0_77], %248 {strides = array<i32>} : memref<8x1xf32, #tpu.memory_space<vmem>>, vector<8x1xf32>,
    return
  }
  func.func @transform_0(%arg0: i32) -> (i32, i32) {
    %c0_i32 = arith.constant 0 : i32
    %c0_i32_0 = arith.constant 0 : i32
    return %arg0, %c0_i32 : i32, i32
  }
  func.func @transform_1(%arg0: i32) -> (i32, i32) {
    %c0_i32 = arith.constant 0 : i32
    %c0_i32_0 = arith.constant 0 : i32
    %c0_i32_1 = arith.constant 0 : i32
    return %c0_i32, %c0_i32_0 : i32, i32
  }
  func.func @transform_2(%arg0: i32) -> (i32, i32) {
    %c0_i32 = arith.constant 0 : i32
    %c0_i32_0 = arith.constant 0 : i32
    %c0_i32_1 = arith.constant 0 : i32
    return %c0_i32, %c0_i32_0 : i32, i32
  }
  func.func @transform_3(%arg0: i32) -> (i32, i32) {
    %c0_i32 = arith.constant 0 : i32
    %c0_i32_0 = arith.constant 0 : i32
    %c0_i32_1 = arith.constant 0 : i32
    return %c0_i32, %c0_i32_0 : i32, i32
  }
  func.func @transform_4(%arg0: i32) -> (i32, i32) {
    %c0_i32 = arith.constant 0 : i32
    %c0_i32_0 = arith.constant 0 : i32
    %c0_i32_1 = arith.constant 0 : i32
    return %c0_i32, %c0_i32_0 : i32, i32
  }
  func.func @transform_5(%arg0: i32) -> (i32, i32) {
    %c0_i32 = arith.constant 0 : i32
    %c0_i32_0 = arith.constant 0 : i32
    %c0_i32_1 = arith.constant 0 : i32
    return %c0_i32, %c0_i32_0 : i32, i32
  }
  func.func @transform_6(%arg0: i32) -> (i32, i32) {
    %c0_i32 = arith.constant 0 : i32
    %c0_i32_0 = arith.constant 0 : i32
    return %arg0, %c0_i32 : i32, i32
  }
}

</mosaic_0001>

<llo_original>
// kernel: _lstm_forward_impl.1
$region0: #{_lstm_forward_impl.1}
  #allocation0 [shape = 'u32[]', space=smem, size = 0x4, offset = 0x4, fixed_abs, tag = 'smem constant byte address 0x4 - core index']
  #allocation1 [shape = 'u32[72,128]{1,0:T(1,128)}', space=vmem, size = 0x9000, scoped, tag = 'internal scratch']
  #allocation2 [shape = 'f32[8,8,256]{2,1,0:T(8,128)}', space=vmem, size = 0x10000, scoped, tag = 'scratch operand']
  #allocation3 [shape = 'f32[1,1]{1,0:T(1,128)S(1)}', space=vmem, size = 0x200, scoped, tag = 'scoped memory for _lstm_forward_impl.1']
  %s0 = inlined_call_operand.vmem [shape: f32[8,8], index: 0, kind: input, shape index: {}]
  %s1 = inlined_call_operand.vmem [shape: f32[1,256], index: 1, kind: input, shape index: {}]
  %s2 = inlined_call_operand.hbm [shape: bf16[64,256], index: 2, kind: input, shape index: {}]
  %s3 = inlined_call_operand.vmem [shape: f32[1,256], index: 3, kind: input, shape index: {}]
  %s4 = inlined_call_operand.vmem [shape: f32[1,64], index: 4, kind: input, shape index: {}]
  %s5 = inlined_call_operand.<no memory space> [shape: f32[1,1], index: 5, kind: input, shape index: {}]
  %s6 = inlined_call_operand.vmem [shape: f32[8,1], index: 6, kind: output, shape index: {}]
  %s7 = sld [smem:[#allocation0]]
  $region38: #{_lstm_forward_impl.1} parent=0
    _
  %s9 = ssub.s32 1, %s7
  %s10 = scalar_select 0, %s9, %s7
  %v11 = vstv %s5
  %12 = vst [vmem:[#allocation3] sm:$0x1] %v11
  $region1: #{_lstm_forward_impl.1} parent=0
    #allocation4 [shape = 'u8[32768]{0}', space=vmem, size = 0x8000, scoped, tag = 'input window, operand 2, single buffered']
    #allocation5 [shape = 's32[1]{0}', space=sflag, size = 0x4, scoped, tag = 'scoped memory for _lstm_forward_impl.1']
    %13 = vsyncpa [#allocation5], 0
    // Predicated region
    $region2: #{_lstm_forward_impl.1} parent=1 // pred_check
      _
    $region3: #{_lstm_forward_impl.1} parent=1 // pred_check_branch
      %15 = sbr.rel (0) target = $region5
    $region4: #{_lstm_forward_impl.1} parent=1 // pred_region
      _
    $region5: #{_lstm_forward_impl.1} parent=1 // pred_fallthru
      _
    // Predicated region
    $region6: #{_lstm_forward_impl.1} parent=1 // pred_check
      _
    $region7: #{_lstm_forward_impl.1} parent=1 // pred_check_branch
      %17 = sbr.rel (0) target = $region9
    $region8: #{_lstm_forward_impl.1} parent=1 // pred_region
      _
    $region9: #{_lstm_forward_impl.1} parent=1 // pred_fallthru
      _
    // Predicated region
    $region10: #{_lstm_forward_impl.1} parent=1 // pred_check
      _
    $region11: #{_lstm_forward_impl.1} parent=1 // pred_check_branch
      %19 = sbr.rel (0) target = $region13
    $region12: #{_lstm_forward_impl.1} parent=1 // pred_region
      %21 = vsyncadd [#allocation5], 0
      %s22 = sshll.u32 %s2, 4
      %s23 = int_to_ptr.hbm [resolvable:$true] %s22
      %s24 = sshll.u32 [#allocation4], 4
      %s25 = int_to_ptr.vmem [resolvable:$true] %s24
      %30 = dma.hbm_to_vmem [thread:$0]  %s23, 1024, %s25, [#allocation5], 128, 128, 8
    $region13: #{_lstm_forward_impl.1} parent=1 // pred_fallthru
      _
    // Predicated region
    $region14: #{_lstm_forward_impl.1} parent=1 // pred_check
      _
    $region15: #{_lstm_forward_impl.1} parent=1 // pred_check_branch
      %32 = sbr.rel (0) target = $region17
    $region16: #{_lstm_forward_impl.1} parent=1 // pred_region
      _
    $region17: #{_lstm_forward_impl.1} parent=1 // pred_fallthru
      _
    // Predicated region
    $region18: #{_lstm_forward_impl.1} parent=1 // pred_check
      _
    $region19: #{_lstm_forward_impl.1} parent=1 // pred_check_branch
      %34 = sbr.rel (0) target = $region21
    $region20: #{_lstm_forward_impl.1} parent=1 // pred_region
      _
    $region21: #{_lstm_forward_impl.1} parent=1 // pred_fallthru
      _
    // Predicated region
    $region22: #{_lstm_forward_impl.1} parent=1 // pred_check
      _
    $region23: #{_lstm_forward_impl.1} parent=1 // pred_check_branch
      %36 = sbr.rel (0) target = $region25
    $region24: #{_lstm_forward_impl.1} parent=1 // pred_region
      _
    $region25: #{_lstm_forward_impl.1} parent=1 // pred_fallthru
      _
    // Predicated region
    $region26: #{_lstm_forward_impl.1} parent=1 // pred_check
      _
    $region27: #{_lstm_forward_impl.1} parent=1 // pred_check_branch
      %38 = sbr.rel (0) target = $region29
    $region28: #{_lstm_forward_impl.1} parent=1 // pred_region
      %40 = dma.done [#allocation5], 1024
    $region29: #{_lstm_forward_impl.1} parent=1 // pred_fallthru
      _
    %v42 = vld [vmem:[%s1] sm:$0x3]
    %v44 = vperm.slane %v42, 0
    %v45 = vperm.slane %v42, 1
    %v48 = vld [vmem:[%s3] sm:$0x3]
    %v50 = vperm.slane %v48, 0
    %v51 = vperm.slane %v48, 1
    %v54 = vld [vmem:[%s0] sm:$0xff]
    %56 = vset.pattern.permute.xlu0 0
    %57 = vperm.xlu0 %56, %v54
    %v58 = vpop.permute.xlu0 %57
    %v60 = vmul.f32 %v58, %v44
    %v61 = vmul.f32 %v58, %v45
    %v62 = vadd.f32 %v60, %v50
    %v63 = vadd.f32 %v61, %v51
    %64 = vst [vmem:[#allocation2] sm:$0xff] %v62
    %65 = vst [vmem:[#allocation2 + $0x8] sm:$0xff] %v63
    %v66 = vld [vmem:[%s0] sm:$0xff]
    %68 = vset.pattern.permute.xlu0 1
    %69 = vperm.xlu0 %68, %v66
    %v70 = vpop.permute.xlu0 %69
    %v72 = vmul.f32 %v70, %v44
    %v73 = vmul.f32 %v70, %v45
    %v74 = vadd.f32 %v72, %v50
    %v75 = vadd.f32 %v73, %v51
    %s76 = scalar_lea.vmem [#allocation2], 16
    %77 = vst [vmem:[%s76] sm:$0xff] %v74
    %78 = vst [vmem:[%s76 + $0x8] sm:$0xff] %v75
    %v79 = vld [vmem:[%s0] sm:$0xff]
    %81 = vset.pattern.permute.xlu0 2
    %82 = vperm.xlu0 %81, %v79
    %v83 = vpop.permute.xlu0 %82
    %v85 = vmul.f32 %v83, %v44
    %v86 = vmul.f32 %v83, %v45
    %v87 = vadd.f32 %v85, %v50
    %v88 = vadd.f32 %v86, %v51
    %s89 = scalar_lea.vmem [#allocation2], 32
    %90 = vst [vmem:[%s89] sm:$0xff] %v87
    %91 = vst [vmem:[%s89 + $0x8] sm:$0xff] %v88
    %v92 = vld [vmem:[%s0] sm:$0xff]
    %94 = vset.pattern.permute.xlu0 3
    %95 = vperm.xlu0 %94, %v92
    %v96 = vpop.permute.xlu0 %95
    %v98 = vmul.f32 %v96, %v44
    %v99 = vmul.f32 %v96, %v45
    %v100 = vadd.f32 %v98, %v50
    %v101 = vadd.f32 %v99, %v51
    %s102 = scalar_lea.vmem [#allocation2], 48
    %103 = vst [vmem:[%s102] sm:$0xff] %v100
    %104 = vst [vmem:[%s102 + $0x8] sm:$0xff] %v101
    %v105 = vld [vmem:[%s0] sm:$0xff]
    %107 = vset.pattern.permute.xlu0 4
    %108 = vperm.xlu0 %107, %v105
    %v109 = vpop.permute.xlu0 %108
    %v111 = vmul.f32 %v109, %v44
    %v112 = vmul.f32 %v109, %v45
    %v113 = vadd.f32 %v111, %v50
    %v114 = vadd.f32 %v112, %v51
    %s115 = scalar_lea.vmem [#allocation2], 64
    %116 = vst [vmem:[%s115] sm:$0xff] %v113
    %117 = vst [vmem:[%s115 + $0x8] sm:$0xff] %v114
    %v118 = vld [vmem:[%s0] sm:$0xff]
    %120 = vset.pattern.permute.xlu0 5
    %121 = vperm.xlu0 %120, %v118
    %v122 = vpop.permute.xlu0 %121
    %v124 = vmul.f32 %v122, %v44
    %v125 = vmul.f32 %v122, %v45
    %v126 = vadd.f32 %v124, %v50
    %v127 = vadd.f32 %v125, %v51
    %s128 = scalar_lea.vmem [#allocation2], 80
    %129 = vst [vmem:[%s128] sm:$0xff] %v126
    %130 = vst [vmem:[%s128 + $0x8] sm:$0xff] %v127
    %v131 = vld [vmem:[%s0] sm:$0xff]
    %133 = vset.pattern.permute.xlu0 6
    %134 = vperm.xlu0 %133, %v131
    %v135 = vpop.permute.xlu0 %134
    %v137 = vmul.f32 %v135, %v44
    %v138 = vmul.f32 %v135, %v45
    %v139 = vadd.f32 %v137, %v50
    %v140 = vadd.f32 %v138, %v51
    %s141 = scalar_lea.vmem [#allocation2], 96
    %142 = vst [vmem:[%s141] sm:$0xff] %v139
    %143 = vst [vmem:[%s141 + $0x8] sm:$0xff] %v140
    %v144 = vld [vmem:[%s0] sm:$0xff]
    %146 = vset.pattern.permute.xlu0 7
    %147 = vperm.xlu0 %146, %v144
    %v148 = vpop.permute.xlu0 %147
    %v150 = vmul.f32 %v148, %v44
    %v151 = vmul.f32 %v148, %v45
    %v152 = vadd.f32 %v150, %v50
    %v153 = vadd.f32 %v151, %v51
    %s154 = scalar_lea.vmem [#allocation2], 112
    %155 = vst [vmem:[%s154] sm:$0xff] %v152
    %156 = vst [vmem:[%s154 + $0x8] sm:$0xff] %v153
    %v157 = vld [vmem:[#allocation4] sm:$0xff]
    %v158 = vld [vmem:[#allocation4 + $0x8] sm:$0xff]
    %v159 = vld [vmem:[#allocation4 + $0x10] sm:$0xff]
    %v160 = vld [vmem:[#allocation4 + $0x18] sm:$0xff]
    %v161 = vld [vmem:[#allocation4 + $0x20] sm:$0xff]
    %v162 = vld [vmem:[#allocation4 + $0x28] sm:$0xff]
    %v163 = vld [vmem:[#allocation4 + $0x30] sm:$0xff]
    %v164 = vld [vmem:[#allocation4 + $0x38] sm:$0xff]
    %v165 = vld [vmem:[#allocation2] sm:$0xff]
    %v166 = vld [vmem:[#allocation2 + $0x8] sm:$0xff]
    %v175 = vunpack.c.l.b16 %v157
    %v176 = vunpack.c.h.b16 %v157
    %v177 = vunpack.c.l.b16 %v158
    %v178 = vunpack.c.h.b16 %v158
    %v179 = vunpack.c.l.b16 %v159
    %v180 = vunpack.c.h.b16 %v159
    %v181 = vunpack.c.l.b16 %v160
    %v182 = vunpack.c.h.b16 %v160
    %v183 = vunpack.c.l.b16 %v161
    %v184 = vunpack.c.h.b16 %v161
    %v185 = vunpack.c.l.b16 %v162
    %v186 = vunpack.c.h.b16 %v162
    %v187 = vunpack.c.l.b16 %v163
    %v188 = vunpack.c.h.b16 %v163
    %v189 = vunpack.c.l.b16 %v164
    %v190 = vunpack.c.h.b16 %v164
    %v191 = vpack.c.b16 %v177, %v175
    %v192 = vpack.c.b16 %v178, %v176
    %v193 = vpack.c.b16 %v181, %v179
    %v194 = vpack.c.b16 %v182, %v180
    %v195 = vpack.c.b16 %v185, %v183
    %v196 = vpack.c.b16 %v186, %v184
    %v197 = vpack.c.b16 %v189, %v187
    %v198 = vpack.c.b16 %v190, %v188
    %vm207 = vcmask 523264
    %v209 = vsel %vm207, 0, 0
    %211 = vmatpush.bf16.msra.mxu0 0
    %212 = vmatpush.bf16.msra.mxu0 0
    %213 = vmatpush.bf16.msra.mxu0 0
    %214 = vmatpush.bf16.msra.mxu0 0
    %215 = vmatpush.bf16.msra.mxu0 %v197
    %216 = vmatpush.bf16.msra.mxu0 %v195
    %217 = vmatpush.bf16.msra.mxu0 %v193
    %218 = vmatpush.bf16.msra.mxu0 %v191
    %219 = vmatmul.bf16.gmra.mxu0 %v209
    %v220 = vpop.f32.mrf.mxu0
    %v221 = vadd.f32 0.0, %v220
    %v222 = vpop.f32.mrf.mxu0
    %223 = vdwg.mxu0
    %224 = vmatpush.bf16.msra.mxu0 0
    %225 = vmatpush.bf16.msra.mxu0 0
    %226 = vmatpush.bf16.msra.mxu0 0
    %227 = vmatpush.bf16.msra.mxu0 0
    %228 = vmatpush.bf16.msra.mxu0 %v198
    %229 = vmatpush.bf16.msra.mxu0 %v196
    %230 = vmatpush.bf16.msra.mxu0 %v194
    %231 = vmatpush.bf16.msra.mxu0 %v192
    %232 = vmatmul.bf16.gmra.mxu0 %v209
    %v233 = vpop.f32.mrf.mxu0
    %v234 = vadd.f32 0.0, %v233
    %v235 = vpop.f32.mrf.mxu0
    %236 = vdwg.mxu0
    %v237 = vadd.f32 %v165, %v221
    %v238 = vadd.f32 %v166, %v234
    %v239 = vxor.u32 %v237, 2147483648
    %v240 = vxor.u32 %v238, 2147483648
    %v241 = vmul.f32 %v239, 1.442695
    %v242 = vpow.pop %v241
    %v243 = vmul.f32 %v240, 1.442695
    %v244 = vpow.pop %v243
    %v245 = vadd.f32 %v242, 1.0
    %v246 = vadd.f32 %v244, 1.0
    %v247 = vrcp.pop %v245
    %v248 = vmul.f32 %v245, %v247
    %v249 = vsub.f32 1.0, %v248
    %v250 = vmul.f32 %v247, %v249
    %v251 = vadd.f32 %v247, %v250
    %vm252 = vweird.f32 %v245
    %vm253 = vweird.f32 %v247
    %vm254 = vmor %vm252, %vm253
    %v255 = vsel %vm254, %v247, %v251
    %v256 = vand.u32 2147483647, %v245
    %vm257 = vcmp.eq.f32.partialorder %v256, 8.507059e+37
    %v258 = vand.u32 %v245, 2147483648
    %v259 = vor.u32 1.1754944e-38, %v258
    %v260 = vsel %vm257, %v259, %v255
    %v261 = vmul.f32 1.0, %v260
    %v262 = vrcp.pop %v246
    %v263 = vmul.f32 %v246, %v262
    %v264 = vsub.f32 1.0, %v263
    %v265 = vmul.f32 %v262, %v264
    %v266 = vadd.f32 %v262, %v265
    %vm267 = vweird.f32 %v246
    %vm268 = vweird.f32 %v262
    %vm269 = vmor %vm267, %vm268
    %v270 = vsel %vm269, %v262, %v266
    %v271 = vand.u32 2147483647, %v246
    %vm272 = vcmp.eq.f32.partialorder %v271, 8.507059e+37
    %v273 = vand.u32 %v246, 2147483648
    %v274 = vor.u32 1.1754944e-38, %v273
    %v275 = vsel %vm272, %v274, %v270
    %v276 = vmul.f32 1.0, %v275
    %v277 = vtanh.pop %v238
    %v278 = vmul.f32 %v261, 0.0
    %280 = vrot.lane.b32.xlu0 %v277, 64
    %v281 = vpop.permute.xlu0 %280
    %v283 = vmul.f32 %v261, %v281
    %285 = vrot.lane.b32.xlu0 %v283, 64
    %v286 = vpop.permute.xlu0 %285
    %v288 = vadd.f32 %v278, %v286
    %v289 = vtanh.pop %v288
    %291 = vrot.lane.b32.xlu0 %v289, 64
    %v292 = vpop.permute.xlu0 %291
    %v294 = vmul.f32 %v276, %v292
    %v295 = vld [vmem:[%s76] sm:$0xff]
    %v296 = vld [vmem:[%s76 + $0x8] sm:$0xff]
    %v297 = vpack.c.bf16 %v294, %v294
    %v299 = vsel %vm207, %v297, 0
    %301 = vmatpush.bf16.msra.mxu0 0
    %302 = vmatpush.bf16.msra.mxu0 0
    %303 = vmatpush.bf16.msra.mxu0 0
    %304 = vmatpush.bf16.msra.mxu0 0
    %305 = vmatpush.bf16.msra.mxu0 %v197
    %306 = vmatpush.bf16.msra.mxu0 %v195
    %307 = vmatpush.bf16.msra.mxu0 %v193
    %308 = vmatpush.bf16.msra.mxu0 %v191
    %309 = vmatmul.bf16.gmra.mxu0 %v299
    %v310 = vpop.f32.mrf.mxu0
    %v311 = vadd.f32 0.0, %v310
    %v312 = vpop.f32.mrf.mxu0
    %313 = vdwg.mxu0
    %314 = vmatpush.bf16.msra.mxu0 0
    %315 = vmatpush.bf16.msra.mxu0 0
    %316 = vmatpush.bf16.msra.mxu0 0
    %317 = vmatpush.bf16.msra.mxu0 0
    %318 = vmatpush.bf16.msra.mxu0 %v198
    %319 = vmatpush.bf16.msra.mxu0 %v196
    %320 = vmatpush.bf16.msra.mxu0 %v194
    %321 = vmatpush.bf16.msra.mxu0 %v192
    %322 = vmatmul.bf16.gmra.mxu0 %v299
    %v323 = vpop.f32.mrf.mxu0
    %v324 = vadd.f32 0.0, %v323
    %v325 = vpop.f32.mrf.mxu0
    %326 = vdwg.mxu0
    %v327 = vadd.f32 %v295, %v311
    %v328 = vadd.f32 %v296, %v324
    %v329 = vxor.u32 %v327, 2147483648
    %v330 = vxor.u32 %v328, 2147483648
    %v331 = vmul.f32 %v329, 1.442695
    %v332 = vpow.pop %v331
    %v333 = vmul.f32 %v330, 1.442695
    %v334 = vpow.pop %v333
    %v335 = vadd.f32 %v332, 1.0
    %v336 = vadd.f32 %v334, 1.0
    %v337 = vrcp.pop %v335
    %v338 = vmul.f32 %v335, %v337
    %v339 = vsub.f32 1.0, %v338
    %v340 = vmul.f32 %v337, %v339
    %v341 = vadd.f32 %v337, %v340
    %vm342 = vweird.f32 %v335
    %vm343 = vweird.f32 %v337
    %vm344 = vmor %vm342, %vm343
    %v345 = vsel %vm344, %v337, %v341
    %v346 = vand.u32 2147483647, %v335
    %vm347 = vcmp.eq.f32.partialorder %v346, 8.507059e+37
    %v348 = vand.u32 %v335, 2147483648
    %v349 = vor.u32 1.1754944e-38, %v348
    %v350 = vsel %vm347, %v349, %v345
    %v351 = vmul.f32 1.0, %v350
    %v352 = vrcp.pop %v336
    %v353 = vmul.f32 %v336, %v352
    %v354 = vsub.f32 1.0, %v353
    %v355 = vmul.f32 %v352, %v354
    %v356 = vadd.f32 %v352, %v355
    %vm357 = vweird.f32 %v336
    %vm358 = vweird.f32 %v352
    %vm359 = vmor %vm357, %vm358
    %v360 = vsel %vm359, %v352, %v356
    %v361 = vand.u32 2147483647, %v336
    %vm362 = vcmp.eq.f32.partialorder %v361, 8.507059e+37
    %v363 = vand.u32 %v336, 2147483648
    %v364 = vor.u32 1.1754944e-38, %v363
    %v365 = vsel %vm362, %v364, %v360
    %v366 = vmul.f32 1.0, %v365
    %v367 = vtanh.pop %v328
    %v368 = vmul.f32 %v351, %v288
    %370 = vrot.lane.b32.xlu0 %v367, 64
    %v371 = vpop.permute.xlu0 %370
    %v373 = vmul.f32 %v351, %v371
    %375 = vrot.lane.b32.xlu0 %v373, 64
    %v376 = vpop.permute.xlu0 %375
    %v378 = vadd.f32 %v368, %v376
    %v379 = vtanh.pop %v378
    %381 = vrot.lane.b32.xlu0 %v379, 64
    %v382 = vpop.permute.xlu0 %381
    %v384 = vmul.f32 %v366, %v382
    %v385 = vld [vmem:[%s89] sm:$0xff]
    %v386 = vld [vmem:[%s89 + $0x8] sm:$0xff]
    %v387 = vpack.c.bf16 %v384, %v384
    %v389 = vsel %vm207, %v387, 0
    %391 = vmatpush.bf16.msra.mxu0 0
    %392 = vmatpush.bf16.msra.mxu0 0
    %393 = vmatpush.bf16.msra.mxu0 0
    %394 = vmatpush.bf16.msra.mxu0 0
    %395 = vmatpush.bf16.msra.mxu0 %v197
    %396 = vmatpush.bf16.msra.mxu0 %v195
    %397 = vmatpush.bf16.msra.mxu0 %v193
    %398 = vmatpush.bf16.msra.mxu0 %v191
    %399 = vmatmul.bf16.gmra.mxu0 %v389
    %v400 = vpop.f32.mrf.mxu0
    %v401 = vadd.f32 0.0, %v400
    %v402 = vpop.f32.mrf.mxu0
    %403 = vdwg.mxu0
    %404 = vmatpush.bf16.msra.mxu0 0
    %405 = vmatpush.bf16.msra.mxu0 0
    %406 = vmatpush.bf16.msra.mxu0 0
    %407 = vmatpush.bf16.msra.mxu0 0
    %408 = vmatpush.bf16.msra.mxu0 %v198
    %409 = vmatpush.bf16.msra.mxu0 %v196
    %410 = vmatpush.bf16.msra.mxu0 %v194
    %411 = vmatpush.bf16.msra.mxu0 %v192
    %412 = vmatmul.bf16.gmra.mxu0 %v389
    %v413 = vpop.f32.mrf.mxu0
    %v414 = vadd.f32 0.0, %v413
    %v415 = vpop.f32.mrf.mxu0
    %416 = vdwg.mxu0
    %v417 = vadd.f32 %v385, %v401
    %v418 = vadd.f32 %v386, %v414
    %v419 = vxor.u32 %v417, 2147483648
    %v420 = vxor.u32 %v418, 2147483648
    %v421 = vmul.f32 %v419, 1.442695
    %v422 = vpow.pop %v421
    %v423 = vmul.f32 %v420, 1.442695
    %v424 = vpow.pop %v423
    %v425 = vadd.f32 %v422, 1.0
    %v426 = vadd.f32 %v424, 1.0
    %v427 = vrcp.pop %v425
    %v428 = vmul.f32 %v425, %v427
    %v429 = vsub.f32 1.0, %v428
    %v430 = vmul.f32 %v427, %v429
    %v431 = vadd.f32 %v427, %v430
    %vm432 = vweird.f32 %v425
    %vm433 = vweird.f32 %v427
    %vm434 = vmor %vm432, %vm433
    %v435 = vsel %vm434, %v427, %v431
    %v436 = vand.u32 2147483647, %v425
    %vm437 = vcmp.eq.f32.partialorder %v436, 8.507059e+37
    %v438 = vand.u32 %v425, 2147483648
    %v439 = vor.u32 1.1754944e-38, %v438
    %v440 = vsel %vm437, %v439, %v435
    %v441 = vmul.f32 1.0, %v440
    %v442 = vrcp.pop %v426
    %v443 = vmul.f32 %v426, %v442
    %v444 = vsub.f32 1.0, %v443
    %v445 = vmul.f32 %v442, %v444
    %v446 = vadd.f32 %v442, %v445
    %vm447 = vweird.f32 %v426
    %vm448 = vweird.f32 %v442
    %vm449 = vmor %vm447, %vm448
    %v450 = vsel %vm449, %v442, %v446
    %v451 = vand.u32 2147483647, %v426
    %vm452 = vcmp.eq.f32.partialorder %v451, 8.507059e+37
    %v453 = vand.u32 %v426, 2147483648
    %v454 = vor.u32 1.1754944e-38, %v453
    %v455 = vsel %vm452, %v454, %v450
    %v456 = vmul.f32 1.0, %v455
    %v457 = vtanh.pop %v418
    %v458 = vmul.f32 %v441, %v378
    %460 = vrot.lane.b32.xlu0 %v457, 64
    %v461 = vpop.permute.xlu0 %460
    %v463 = vmul.f32 %v441, %v461
    %465 = vrot.lane.b32.xlu0 %v463, 64
    %v466 = vpop.permute.xlu0 %465
    %v468 = vadd.f32 %v458, %v466
    %v469 = vtanh.pop %v468
    %471 = vrot.lane.b32.xlu0 %v469, 64
    %v472 = vpop.permute.xlu0 %471
    %v474 = vmul.f32 %v456, %v472
    %v475 = vld [vmem:[%s102] sm:$0xff]
    %v476 = vld [vmem:[%s102 + $0x8] sm:$0xff]
    %v477 = vpack.c.bf16 %v474, %v474
    %v479 = vsel %vm207, %v477, 0
    %481 = vmatpush.bf16.msra.mxu0 0
    %482 = vmatpush.bf16.msra.mxu0 0
    %483 = vmatpush.bf16.msra.mxu0 0
    %484 = vmatpush.bf16.msra.mxu0 0
    %485 = vmatpush.bf16.msra.mxu0 %v197
    %486 = vmatpush.bf16.msra.mxu0 %v195
    %487 = vmatpush.bf16.msra.mxu0 %v193
    %488 = vmatpush.bf16.msra.mxu0 %v191
    %489 = vmatmul.bf16.gmra.mxu0 %v479
    %v490 = vpop.f32.mrf.mxu0
    %v491 = vadd.f32 0.0, %v490
    %v492 = vpop.f32.mrf.mxu0
    %493 = vdwg.mxu0
    %494 = vmatpush.bf16.msra.mxu0 0
    %495 = vmatpush.bf16.msra.mxu0 0
    %496 = vmatpush.bf16.msra.mxu0 0
    %497 = vmatpush.bf16.msra.mxu0 0
    %498 = vmatpush.bf16.msra.mxu0 %v198
    %499 = vmatpush.bf16.msra.mxu0 %v196
    %500 = vmatpush.bf16.msra.mxu0 %v194
    %501 = vmatpush.bf16.msra.mxu0 %v192
    %502 = vmatmul.bf16.gmra.mxu0 %v479
    %v503 = vpop.f32.mrf.mxu0
    %v504 = vadd.f32 0.0, %v503
    %v505 = vpop.f32.mrf.mxu0
    %506 = vdwg.mxu0
    %v507 = vadd.f32 %v475, %v491
    %v508 = vadd.f32 %v476, %v504
    %v509 = vxor.u32 %v507, 2147483648
    %v510 = vxor.u32 %v508, 2147483648
    %v511 = vmul.f32 %v509, 1.442695
    %v512 = vpow.pop %v511
    %v513 = vmul.f32 %v510, 1.442695
    %v514 = vpow.pop %v513
    %v515 = vadd.f32 %v512, 1.0
    %v516 = vadd.f32 %v514, 1.0
    %v517 = vrcp.pop %v515
    %v518 = vmul.f32 %v515, %v517
    %v519 = vsub.f32 1.0, %v518
    %v520 = vmul.f32 %v517, %v519
    %v521 = vadd.f32 %v517, %v520
    %vm522 = vweird.f32 %v515
    %vm523 = vweird.f32 %v517
    %vm524 = vmor %vm522, %vm523
    %v525 = vsel %vm524, %v517, %v521
    %v526 = vand.u32 2147483647, %v515
    %vm527 = vcmp.eq.f32.partialorder %v526, 8.507059e+37
    %v528 = vand.u32 %v515, 2147483648
    %v529 = vor.u32 1.1754944e-38, %v528
    %v530 = vsel %vm527, %v529, %v525
    %v531 = vmul.f32 1.0, %v530
    %v532 = vrcp.pop %v516
    %v533 = vmul.f32 %v516, %v532
    %v534 = vsub.f32 1.0, %v533
    %v535 = vmul.f32 %v532, %v534
    %v536 = vadd.f32 %v532, %v535
    %vm537 = vweird.f32 %v516
    %vm538 = vweird.f32 %v532
    %vm539 = vmor %vm537, %vm538
    %v540 = vsel %vm539, %v532, %v536
    %v541 = vand.u32 2147483647, %v516
    %vm542 = vcmp.eq.f32.partialorder %v541, 8.507059e+37
    %v543 = vand.u32 %v516, 2147483648
    %v544 = vor.u32 1.1754944e-38, %v543
    %v545 = vsel %vm542, %v544, %v540
    %v546 = vmul.f32 1.0, %v545
    %v547 = vtanh.pop %v508
    %v548 = vmul.f32 %v531, %v468
    %550 = vrot.lane.b32.xlu0 %v547, 64
    %v551 = vpop.permute.xlu0 %550
    %v553 = vmul.f32 %v531, %v551
    %555 = vrot.lane.b32.xlu0 %v553, 64
    %v556 = vpop.permute.xlu0 %555
    %v558 = vadd.f32 %v548, %v556
    %v559 = vtanh.pop %v558
    %561 = vrot.lane.b32.xlu0 %v559, 64
    %v562 = vpop.permute.xlu0 %561
    %v564 = vmul.f32 %v546, %v562
    %v565 = vld [vmem:[%s115] sm:$0xff]
    %v566 = vld [vmem:[%s115 + $0x8] sm:$0xff]
    %v567 = vpack.c.bf16 %v564, %v564
    %v569 = vsel %vm207, %v567, 0
    %571 = vmatpush.bf16.msra.mxu0 0
    %572 = vmatpush.bf16.msra.mxu0 0
    %573 = vmatpush.bf16.msra.mxu0 0
    %574 = vmatpush.bf16.msra.mxu0 0
    %575 = vmatpush.bf16.msra.mxu0 %v197
    %576 = vmatpush.bf16.msra.mxu0 %v195
    %577 = vmatpush.bf16.msra.mxu0 %v193
    %578 = vmatpush.bf16.msra.mxu0 %v191
    %579 = vmatmul.bf16.gmra.mxu0 %v569
    %v580 = vpop.f32.mrf.mxu0
    %v581 = vadd.f32 0.0, %v580
    %v582 = vpop.f32.mrf.mxu0
    %583 = vdwg.mxu0
    %584 = vmatpush.bf16.msra.mxu0 0
    %585 = vmatpush.bf16.msra.mxu0 0
    %586 = vmatpush.bf16.msra.mxu0 0
    %587 = vmatpush.bf16.msra.mxu0 0
    %588 = vmatpush.bf16.msra.mxu0 %v198
    %589 = vmatpush.bf16.msra.mxu0 %v196
    %590 = vmatpush.bf16.msra.mxu0 %v194
    %591 = vmatpush.bf16.msra.mxu0 %v192
    %592 = vmatmul.bf16.gmra.mxu0 %v569
    %v593 = vpop.f32.mrf.mxu0
    %v594 = vadd.f32 0.0, %v593
    %v595 = vpop.f32.mrf.mxu0
    %596 = vdwg.mxu0
    %v597 = vadd.f32 %v565, %v581
    %v598 = vadd.f32 %v566, %v594
    %v599 = vxor.u32 %v597, 2147483648
    %v600 = vxor.u32 %v598, 2147483648
    %v601 = vmul.f32 %v599, 1.442695
    %v602 = vpow.pop %v601
    %v603 = vmul.f32 %v600, 1.442695
    %v604 = vpow.pop %v603
    %v605 = vadd.f32 %v602, 1.0
    %v606 = vadd.f32 %v604, 1.0
    %v607 = vrcp.pop %v605
    %v608 = vmul.f32 %v605, %v607
    %v609 = vsub.f32 1.0, %v608
    %v610 = vmul.f32 %v607, %v609
    %v611 = vadd.f32 %v607, %v610
    %vm612 = vweird.f32 %v605
    %vm613 = vweird.f32 %v607
    %vm614 = vmor %vm612, %vm613
    %v615 = vsel %vm614, %v607, %v611
    %v616 = vand.u32 2147483647, %v605
    %vm617 = vcmp.eq.f32.partialorder %v616, 8.507059e+37
    %v618 = vand.u32 %v605, 2147483648
    %v619 = vor.u32 1.1754944e-38, %v618
    %v620 = vsel %vm617, %v619, %v615
    %v621 = vmul.f32 1.0, %v620
    %v622 = vrcp.pop %v606
    %v623 = vmul.f32 %v606, %v622
    %v624 = vsub.f32 1.0, %v623
    %v625 = vmul.f32 %v622, %v624
    %v626 = vadd.f32 %v622, %v625
    %vm627 = vweird.f32 %v606
    %vm628 = vweird.f32 %v622
    %vm629 = vmor %vm627, %vm628
    %v630 = vsel %vm629, %v622, %v626
    %v631 = vand.u32 2147483647, %v606
    %vm632 = vcmp.eq.f32.partialorder %v631, 8.507059e+37
    %v633 = vand.u32 %v606, 2147483648
    %v634 = vor.u32 1.1754944e-38, %v633
    %v635 = vsel %vm632, %v634, %v630
    %v636 = vmul.f32 1.0, %v635
    %v637 = vtanh.pop %v598
    %v638 = vmul.f32 %v621, %v558
    %640 = vrot.lane.b32.xlu0 %v637, 64
    %v641 = vpop.permute.xlu0 %640
    %v643 = vmul.f32 %v621, %v641
    %645 = vrot.lane.b32.xlu0 %v643, 64
    %v646 = vpop.permute.xlu0 %645
    %v648 = vadd.f32 %v638, %v646
    %v649 = vtanh.pop %v648
    %651 = vrot.lane.b32.xlu0 %v649, 64
    %v652 = vpop.permute.xlu0 %651
    %v654 = vmul.f32 %v636, %v652
    %v655 = vld [vmem:[%s128] sm:$0xff]
    %v656 = vld [vmem:[%s128 + $0x8] sm:$0xff]
    %v657 = vpack.c.bf16 %v654, %v654
    %v659 = vsel %vm207, %v657, 0
    %661 = vmatpush.bf16.msra.mxu0 0
    %662 = vmatpush.bf16.msra.mxu0 0
    %663 = vmatpush.bf16.msra.mxu0 0
    %664 = vmatpush.bf16.msra.mxu0 0
    %665 = vmatpush.bf16.msra.mxu0 %v197
    %666 = vmatpush.bf16.msra.mxu0 %v195
    %667 = vmatpush.bf16.msra.mxu0 %v193
    %668 = vmatpush.bf16.msra.mxu0 %v191
    %669 = vmatmul.bf16.gmra.mxu0 %v659
    %v670 = vpop.f32.mrf.mxu0
    %v671 = vadd.f32 0.0, %v670
    %v672 = vpop.f32.mrf.mxu0
    %673 = vdwg.mxu0
    %674 = vmatpush.bf16.msra.mxu0 0
    %675 = vmatpush.bf16.msra.mxu0 0
    %676 = vmatpush.bf16.msra.mxu0 0
    %677 = vmatpush.bf16.msra.mxu0 0
    %678 = vmatpush.bf16.msra.mxu0 %v198
    %679 = vmatpush.bf16.msra.mxu0 %v196
    %680 = vmatpush.bf16.msra.mxu0 %v194
    %681 = vmatpush.bf16.msra.mxu0 %v192
    %682 = vmatmul.bf16.gmra.mxu0 %v659
    %v683 = vpop.f32.mrf.mxu0
    %v684 = vadd.f32 0.0, %v683
    %v685 = vpop.f32.mrf.mxu0
    %686 = vdwg.mxu0
    %v687 = vadd.f32 %v655, %v671
    %v688 = vadd.f32 %v656, %v684
    %v689 = vxor.u32 %v687, 2147483648
    %v690 = vxor.u32 %v688, 2147483648
    %v691 = vmul.f32 %v689, 1.442695
    %v692 = vpow.pop %v691
    %v693 = vmul.f32 %v690, 1.442695
    %v694 = vpow.pop %v693
    %v695 = vadd.f32 %v692, 1.0
    %v696 = vadd.f32 %v694, 1.0
    %v697 = vrcp.pop %v695
    %v698 = vmul.f32 %v695, %v697
    %v699 = vsub.f32 1.0, %v698
    %v700 = vmul.f32 %v697, %v699
    %v701 = vadd.f32 %v697, %v700
    %vm702 = vweird.f32 %v695
    %vm703 = vweird.f32 %v697
    %vm704 = vmor %vm702, %vm703
    %v705 = vsel %vm704, %v697, %v701
    %v706 = vand.u32 2147483647, %v695
    %vm707 = vcmp.eq.f32.partialorder %v706, 8.507059e+37
    %v708 = vand.u32 %v695, 2147483648
    %v709 = vor.u32 1.1754944e-38, %v708
    %v710 = vsel %vm707, %v709, %v705
    %v711 = vmul.f32 1.0, %v710
    %v712 = vrcp.pop %v696
    %v713 = vmul.f32 %v696, %v712
    %v714 = vsub.f32 1.0, %v713
    %v715 = vmul.f32 %v712, %v714
    %v716 = vadd.f32 %v712, %v715
    %vm717 = vweird.f32 %v696
    %vm718 = vweird.f32 %v712
    %vm719 = vmor %vm717, %vm718
    %v720 = vsel %vm719, %v712, %v716
    %v721 = vand.u32 2147483647, %v696
    %vm722 = vcmp.eq.f32.partialorder %v721, 8.507059e+37
    %v723 = vand.u32 %v696, 2147483648
    %v724 = vor.u32 1.1754944e-38, %v723
    %v725 = vsel %vm722, %v724, %v720
    %v726 = vmul.f32 1.0, %v725
    %v727 = vtanh.pop %v688
    %v728 = vmul.f32 %v711, %v648
    %730 = vrot.lane.b32.xlu0 %v727, 64
    %v731 = vpop.permute.xlu0 %730
    %v733 = vmul.f32 %v711, %v731
    %735 = vrot.lane.b32.xlu0 %v733, 64
    %v736 = vpop.permute.xlu0 %735
    %v738 = vadd.f32 %v728, %v736
    %v739 = vtanh.pop %v738
    %741 = vrot.lane.b32.xlu0 %v739, 64
    %v742 = vpop.permute.xlu0 %741
    %v744 = vmul.f32 %v726, %v742
    %v745 = vld [vmem:[%s141] sm:$0xff]
    %v746 = vld [vmem:[%s141 + $0x8] sm:$0xff]
    %v747 = vpack.c.bf16 %v744, %v744
    %v749 = vsel %vm207, %v747, 0
    %751 = vmatpush.bf16.msra.mxu0 0
    %752 = vmatpush.bf16.msra.mxu0 0
    %753 = vmatpush.bf16.msra.mxu0 0
    %754 = vmatpush.bf16.msra.mxu0 0
    %755 = vmatpush.bf16.msra.mxu0 %v197
    %756 = vmatpush.bf16.msra.mxu0 %v195
    %757 = vmatpush.bf16.msra.mxu0 %v193
    %758 = vmatpush.bf16.msra.mxu0 %v191
    %759 = vmatmul.bf16.gmra.mxu0 %v749
    %v760 = vpop.f32.mrf.mxu0
    %v761 = vadd.f32 0.0, %v760
    %v762 = vpop.f32.mrf.mxu0
    %763 = vdwg.mxu0
    %764 = vmatpush.bf16.msra.mxu0 0
    %765 = vmatpush.bf16.msra.mxu0 0
    %766 = vmatpush.bf16.msra.mxu0 0
    %767 = vmatpush.bf16.msra.mxu0 0
    %768 = vmatpush.bf16.msra.mxu0 %v198
    %769 = vmatpush.bf16.msra.mxu0 %v196
    %770 = vmatpush.bf16.msra.mxu0 %v194
    %771 = vmatpush.bf16.msra.mxu0 %v192
    %772 = vmatmul.bf16.gmra.mxu0 %v749
    %v773 = vpop.f32.mrf.mxu0
    %v774 = vadd.f32 0.0, %v773
    %v775 = vpop.f32.mrf.mxu0
    %776 = vdwg.mxu0
    %v777 = vadd.f32 %v745, %v761
    %v778 = vadd.f32 %v746, %v774
    %v779 = vxor.u32 %v777, 2147483648
    %v780 = vxor.u32 %v778, 2147483648
    %v781 = vmul.f32 %v779, 1.442695
    %v782 = vpow.pop %v781
    %v783 = vmul.f32 %v780, 1.442695
    %v784 = vpow.pop %v783
    %v785 = vadd.f32 %v782, 1.0
    %v786 = vadd.f32 %v784, 1.0
    %v787 = vrcp.pop %v785
    %v788 = vmul.f32 %v785, %v787
    %v789 = vsub.f32 1.0, %v788
    %v790 = vmul.f32 %v787, %v789
    %v791 = vadd.f32 %v787, %v790
    %vm792 = vweird.f32 %v785
    %vm793 = vweird.f32 %v787
    %vm794 = vmor %vm792, %vm793
    %v795 = vsel %vm794, %v787, %v791
    %v796 = vand.u32 2147483647, %v785
    %vm797 = vcmp.eq.f32.partialorder %v796, 8.507059e+37
    %v798 = vand.u32 %v785, 2147483648
    %v799 = vor.u32 1.1754944e-38, %v798
    %v800 = vsel %vm797, %v799, %v795
    %v801 = vmul.f32 1.0, %v800
    %v802 = vrcp.pop %v786
    %v803 = vmul.f32 %v786, %v802
    %v804 = vsub.f32 1.0, %v803
    %v805 = vmul.f32 %v802, %v804
    %v806 = vadd.f32 %v802, %v805
    %vm807 = vweird.f32 %v786
    %vm808 = vweird.f32 %v802
    %vm809 = vmor %vm807, %vm808
    %v810 = vsel %vm809, %v802, %v806
    %v811 = vand.u32 2147483647, %v786
    %vm812 = vcmp.eq.f32.partialorder %v811, 8.507059e+37
    %v813 = vand.u32 %v786, 2147483648
    %v814 = vor.u32 1.1754944e-38, %v813
    %v815 = vsel %vm812, %v814, %v810
    %v816 = vmul.f32 1.0, %v815
    %v817 = vtanh.pop %v778
    %v818 = vmul.f32 %v801, %v738
    %820 = vrot.lane.b32.xlu0 %v817, 64
    %v821 = vpop.permute.xlu0 %820
    %v823 = vmul.f32 %v801, %v821
    %825 = vrot.lane.b32.xlu0 %v823, 64
    %v826 = vpop.permute.xlu0 %825
    %v828 = vadd.f32 %v818, %v826
    %v829 = vtanh.pop %v828
    %831 = vrot.lane.b32.xlu0 %v829, 64
    %v832 = vpop.permute.xlu0 %831
    %v834 = vmul.f32 %v816, %v832
    %v835 = vld [vmem:[%s154] sm:$0xff]
    %v836 = vld [vmem:[%s154 + $0x8] sm:$0xff]
    %v837 = vpack.c.bf16 %v834, %v834
    %v839 = vsel %vm207, %v837, 0
    %841 = vmatpush.bf16.msra.mxu0 0
    %842 = vmatpush.bf16.msra.mxu0 0
    %843 = vmatpush.bf16.msra.mxu0 0
    %844 = vmatpush.bf16.msra.mxu0 0
    %845 = vmatpush.bf16.msra.mxu0 %v197
    %846 = vmatpush.bf16.msra.mxu0 %v195
    %847 = vmatpush.bf16.msra.mxu0 %v193
    %848 = vmatpush.bf16.msra.mxu0 %v191
    %849 = vmatmul.bf16.gmra.mxu0 %v839
    %v850 = vpop.f32.mrf.mxu0
    %v851 = vadd.f32 0.0, %v850
    %v852 = vpop.f32.mrf.mxu0
    %853 = vdwg.mxu0
    %854 = vmatpush.bf16.msra.mxu0 0
    %855 = vmatpush.bf16.msra.mxu0 0
    %856 = vmatpush.bf16.msra.mxu0 0
    %857 = vmatpush.bf16.msra.mxu0 0
    %858 = vmatpush.bf16.msra.mxu0 %v198
    %859 = vmatpush.bf16.msra.mxu0 %v196
    %860 = vmatpush.bf16.msra.mxu0 %v194
    %861 = vmatpush.bf16.msra.mxu0 %v192
    %862 = vmatmul.bf16.gmra.mxu0 %v839
    %v863 = vpop.f32.mrf.mxu0
    %v864 = vadd.f32 0.0, %v863
    %v865 = vpop.f32.mrf.mxu0
    %866 = vdwg.mxu0
    %v867 = vadd.f32 %v835, %v851
    %v868 = vadd.f32 %v836, %v864
    %v869 = vxor.u32 %v867, 2147483648
    %v870 = vxor.u32 %v868, 2147483648
    %v871 = vmul.f32 %v869, 1.442695
    %v872 = vpow.pop %v871
    %v873 = vmul.f32 %v870, 1.442695
    %v874 = vpow.pop %v873
    %v875 = vadd.f32 %v872, 1.0
    %v876 = vadd.f32 %v874, 1.0
    %v877 = vrcp.pop %v875
    %v878 = vmul.f32 %v875, %v877
    %v879 = vsub.f32 1.0, %v878
    %v880 = vmul.f32 %v877, %v879
    %v881 = vadd.f32 %v877, %v880
    %vm882 = vweird.f32 %v875
    %vm883 = vweird.f32 %v877
    %vm884 = vmor %vm882, %vm883
    %v885 = vsel %vm884, %v877, %v881
    %v886 = vand.u32 2147483647, %v875
    %vm887 = vcmp.eq.f32.partialorder %v886, 8.507059e+37
    %v888 = vand.u32 %v875, 2147483648
    %v889 = vor.u32 1.1754944e-38, %v888
    %v890 = vsel %vm887, %v889, %v885
    %v891 = vmul.f32 1.0, %v890
    %v892 = vrcp.pop %v876
    %v893 = vmul.f32 %v876, %v892
    %v894 = vsub.f32 1.0, %v893
    %v895 = vmul.f32 %v892, %v894
    %v896 = vadd.f32 %v892, %v895
    %vm897 = vweird.f32 %v876
    %vm898 = vweird.f32 %v892
    %vm899 = vmor %vm897, %vm898
    %v900 = vsel %vm899, %v892, %v896
    %v901 = vand.u32 2147483647, %v876
    %vm902 = vcmp.eq.f32.partialorder %v901, 8.507059e+37
    %v903 = vand.u32 %v876, 2147483648
    %v904 = vor.u32 1.1754944e-38, %v903
    %v905 = vsel %vm902, %v904, %v900
    %v906 = vmul.f32 1.0, %v905
    %v907 = vtanh.pop %v868
    %v908 = vmul.f32 %v891, %v828
    %910 = vrot.lane.b32.xlu0 %v907, 64
    %v911 = vpop.permute.xlu0 %910
    %v913 = vmul.f32 %v891, %v911
    %915 = vrot.lane.b32.xlu0 %v913, 64
    %v916 = vpop.permute.xlu0 %915
    %v918 = vadd.f32 %v908, %v916
    %v919 = vtanh.pop %v918
    %921 = vrot.lane.b32.xlu0 %v919, 64
    %v922 = vpop.permute.xlu0 %921
    %v924 = vmul.f32 %v906, %v922
    %v925 = vld [vmem:[%s4] sm:$0x1]
    %v927 = vperm.slane %v925, 0
    %v929 = vmul.f32 %v924, %v927
    %v930 = vsel %vm207, %v929, 0.0
    %931 = vadd.xlane.f32.xlu0 %v930
    %v932 = vpop.xlane.xlu0 %931
    %v933 = vld [vmem:[#allocation3] sm:$0x1]
    %v935 = vperm.slane %v933, 0
    %v937 = vadd.f32 %v932, %v935
    %vm938 = vcmask 7168
    %939 = vst.msk [vmem:[%s6] sm:$0xff] %vm938, %v937
    // Predicated region
    $region30: #{_lstm_forward_impl.1} parent=1 // pred_check
      _
    $region31: #{_lstm_forward_impl.1} parent=1 // pred_check_branch
      %941 = sbr.rel (0) target = $region33
    $region32: #{_lstm_forward_impl.1} parent=1 // pred_region
      _
    $region33: #{_lstm_forward_impl.1} parent=1 // pred_fallthru
      _
    // Predicated region
    $region34: #{_lstm_forward_impl.1} parent=1 // pred_check
      _
    $region35: #{_lstm_forward_impl.1} parent=1 // pred_check_branch
      %943 = sbr.rel (0) target = $region37
    $region36: #{_lstm_forward_impl.1} parent=1 // pred_region
      _
    $region37: #{_lstm_forward_impl.1} parent=1 // pred_fallthru
      _
    %944 = vsyncpa [#allocation5], 1

</llo_original>
